<compile_context>
chip_gen: v5e
topology: v5e:2x2
jax: 0.10.0
libtpu: 0.0.40
codegen_flags: <defaults>
</compile_context>

<pallas_src>
import functools

import jax
import jax.numpy as jnp
from jax import lax
from jax.experimental import pallas as pl
from jax.experimental.pallas import tpu as pltpu


def _qkv_proj_kernel(x_ref, wq_ref, wk_ref, wv_ref, q_ref, k_ref, v_ref):
    # x_ref:   (1, T, d_in) bf16   current batch row (resident across the head grid axis)
    # w*_ref:  (1, d_in, dh) bf16  per-head projection (Wq already carries 1/sqrt(dh))
    # outputs: (1, 1, T, dh) bf16  head-major q / k / v
    x = x_ref[0]
    q_ref[0, 0] = jnp.dot(x, wq_ref[0], preferred_element_type=jnp.float32).astype(q_ref.dtype)
    k_ref[0, 0] = jnp.dot(x, wk_ref[0], preferred_element_type=jnp.float32).astype(k_ref.dtype)
    v_ref[0, 0] = jnp.dot(x, wv_ref[0], preferred_element_type=jnp.float32).astype(v_ref.dtype)


def _attn_kernel(q_ref, k_ref, v_ref, o_ref, *, tq):
    # q_ref: (1, 1, tq, dh) bf16  pre-scaled query tile
    # k_ref: (1, 1, T,  dh) bf16  full keys for this (b, h)   (resident across query tiles)
    # v_ref: (1, 1, T,  dh) bf16  full values for this (b, h)
    # o_ref: (1, 1, tq, dh)
    qi = pl.program_id(2)
    dh = q_ref.shape[-1]
    q = q_ref[0, 0]                                    # (tq, dh) bf16

    neg = jnp.float32(-1e30)   # finite mask value -> NaN-safe

    def step(col0, carry, masked):
        m, l, acc = carry
        # Ref-level slices: only the needed (tq, dh) K/V slab is loaded per step.
        k = k_ref[0, 0, pl.ds(col0, tq), :]
        v = v_ref[0, 0, pl.ds(col0, tq), :]
        # q @ k^T without materializing a transpose.
        s = lax.dot_general(q, k, (((1,), (1,)), ((), ())),
                            preferred_element_type=jnp.float32)    # (tq, tq) f32
        if masked:  # only the diagonal tile needs the causal mask (col0 == row0 here)
            causal = (lax.broadcasted_iota(jnp.int32, (tq, tq), 1)
                      > lax.broadcasted_iota(jnp.int32, (tq, tq), 0))
            s = jnp.where(causal, neg, s)
        m_new = jnp.maximum(m, jnp.max(s, axis=-1, keepdims=True))
        alpha = jnp.exp(m - m_new)
        p = jnp.exp(s - m_new)
        l_new = alpha * l + jnp.sum(p, axis=-1, keepdims=True)
        acc_new = alpha * acc + jnp.dot(p.astype(jnp.bfloat16), v,
                                        preferred_element_type=jnp.float32)
        return m_new, l_new, acc_new

    init = (jnp.full((tq, 1), neg, dtype=jnp.float32),
            jnp.zeros((tq, 1), dtype=jnp.float32),
            jnp.zeros((tq, dh), dtype=jnp.float32))

    # Causal bounding: visit only KV tiles 0..qi.  Tiles strictly below the diagonal are
    # unmasked; the diagonal tile (always present) gets the triangular mask.
    carry = lax.fori_loop(
        0, qi,
        lambda ki, c: step(pl.multiple_of(ki * tq, tq), c, False),
        init)
    m, l, acc = step(pl.multiple_of(qi * tq, tq), carry, True)

    # Normalize the small (tq, dh) context, never the (tq, tq) score tiles.
    o_ref[0, 0] = (acc * pl.reciprocal(l, approx=False)).astype(o_ref.dtype)


def _pick_tq(T, target=128):
    """Largest multiple-of-8 divisor of T that is <= target (or T itself)."""
    if T <= target:
        return T
    for cand in range(target, 7, -8):
        if T % cand == 0:
            return cand
    # TODO(synk): pad T (ceil-div grid) instead of falling back to full-length query tiles.
    return T


def multi_head_attention(x, wq, wk, wv):
    """
    x : (B, T, d_in) float32
    wq, wk, wv : (H, d_in, d_head) float32  (per-head projection matrices, y = x @ W)
    returns: (B, T, H * d_head) float32  == torch.cat([head(x) for head in heads], dim=-1)
    """
    B, T, d_in = x.shape
    H, _, dh = wq.shape
    Hdh = H * dh

    # Host-side prep: fold 1/sqrt(d_head) into Wq, cast x / weights to bf16 (MXU inputs;
    # f32 accumulation happens inside the kernels).
    scale = jnp.float32(1.0 / (dh ** 0.5))
    x_bf = x.astype(jnp.bfloat16)
    wq_bf = (wq * scale).astype(jnp.bfloat16)
    wk_bf = wk.astype(jnp.bfloat16)
    wv_bf = wv.astype(jnp.bfloat16)

    def vmem_limit(ws_bytes):
        # Keep at least the default scoped limit; grow with the working set, capped
        # safely below physical VMEM on every chip (v7x has 64 MiB total).
        return int(min(64 * 2 ** 20, max(32 * 2 ** 20, 2 * ws_bytes)))

    # ---------------- kernel 1: fused per-head QKV projection (head-major bf16) ----------------
    qkv_sds = jax.ShapeDtypeStruct((B, H, T, dh), jnp.bfloat16)
    proj_ws = 2 * 2 * (T * d_in + 3 * d_in * dh + 3 * T * dh)          # bf16, double buffered
    q, k, v = pl.pallas_call(
        _qkv_proj_kernel,
        out_shape=(qkv_sds, qkv_sds, qkv_sds),
        grid_spec=pltpu.PrefetchScalarGridSpec(
            num_scalar_prefetch=0,
            grid=(B, H),
            in_specs=[
                pl.BlockSpec((1, T, d_in), lambda b, h: (b, 0, 0)),     # x resident across heads
                pl.BlockSpec((1, d_in, dh), lambda b, h: (h, 0, 0)),
                pl.BlockSpec((1, d_in, dh), lambda b, h: (h, 0, 0)),
                pl.BlockSpec((1, d_in, dh), lambda b, h: (h, 0, 0)),
            ],
            out_specs=[
                pl.BlockSpec((1, 1, T, dh), lambda b, h: (b, h, 0, 0)),
                pl.BlockSpec((1, 1, T, dh), lambda b, h: (b, h, 0, 0)),
                pl.BlockSpec((1, 1, T, dh), lambda b, h: (b, h, 0, 0)),
            ]),
        compiler_params=pltpu.CompilerParams(
            dimension_semantics=("parallel", "parallel"),
            vmem_limit_bytes=vmem_limit(proj_ws)),
        cost_estimate=pl.CostEstimate(
            flops=2 * 3 * B * H * T * d_in * dh,
            transcendentals=0,
            bytes_accessed=2 * (B * T * d_in + 3 * H * d_in * dh + 3 * B * H * T * dh)),
    )(x_bf, wq_bf, wk_bf, wv_bf)

    # ---------------- kernel 2: causal flash attention over (batch, head, query tile) ----------
    tq = _pick_tq(T)
    nq = T // tq
    attn_ws = 2 * (tq * dh * 2 + 2 * T * dh * 2 + tq * dh * x.dtype.itemsize)
    out_bhtd = pl.pallas_call(
        functools.partial(_attn_kernel, tq=tq),
        out_shape=jax.ShapeDtypeStruct((B, H, T, dh), x.dtype),
        grid_spec=pltpu.PrefetchScalarGridSpec(
            num_scalar_prefetch=0,
            grid=(B, H, nq),
            in_specs=[
                pl.BlockSpec((1, 1, tq, dh), lambda b, h, i: (b, h, i, 0)),
                pl.BlockSpec((1, 1, T, dh), lambda b, h, i: (b, h, 0, 0)),  # K resident across qi
                pl.BlockSpec((1, 1, T, dh), lambda b, h, i: (b, h, 0, 0)),  # V resident across qi
            ],
            out_specs=pl.BlockSpec((1, 1, tq, dh), lambda b, h, i: (b, h, i, 0))),
        compiler_params=pltpu.CompilerParams(
            # No scratch carried across the grid -> every axis is independent and can be
            # sharded across TensorCores (v7x megacore), including the query-tile axis.
            dimension_semantics=("parallel", "parallel", "parallel"),
            vmem_limit_bytes=vmem_limit(attn_ws)),
        cost_estimate=pl.CostEstimate(
            flops=2 * B * H * T * T * dh,            # ~causal half of the QK^T + PV matmuls
            transcendentals=B * H * T * T // 2,
            bytes_accessed=2 * 3 * B * H * T * dh + x.dtype.itemsize * B * H * T * dh),
    )(q, k, v)

    # torch.cat([head(x) for head in heads], dim=-1): (B, H, T, dh) -> (B, T, H*dh).
    # Pure layout plumbing outside the kernel.
    return jnp.transpose(out_bhtd, (0, 2, 1, 3)).reshape(B, T, Hdh)


def _reference(x, wq, wk, wv):
    """Pure-JAX f32 reference of the PyTorch forward (eval mode)."""
    B, T, d_in = x.shape
    H, _, d_head = wq.shape
    outs = []
    mask = jnp.triu(jnp.ones((T, T), dtype=bool), k=1)
    for h in range(H):
        q = x @ wq[h]
        k = x @ wk[h]
        v = x @ wv[h]
        scores = jnp.einsum("btd,bsd->bts", q, k)
        scores = jnp.where(mask[None], -jnp.inf, scores) / jnp.sqrt(jnp.float32(d_head))
        w = jax.nn.softmax(scores, axis=-1)
        outs.append(jnp.einsum("bts,bsd->btd", w, v))
    return jnp.concatenate(outs, axis=-1)


if __name__ == "__main__":
    # small shapes consistent with the module
    B = 2                # batch
    T = 8                # context_length / num_tokens
    d_in = 32            # embedding dim
    num_heads = 4
    d_out = 32           # total output dim; per-head = d_out / num_heads
    d_head = d_out // num_heads

    key = jax.random.PRNGKey(0)
    kx, kq, kk, kv = jax.random.split(key, 4)
    x = jax.random.normal(kx, (B, T, d_in), dtype=jnp.float32)
    # deterministic per-head projection weights (qkv_bias=False, so no biases)
    wq = jax.random.normal(kq, (num_heads, d_in, d_head), dtype=jnp.float32) * 0.1
    wk = jax.random.normal(kk, (num_heads, d_in, d_head), dtype=jnp.float32) * 0.1
    wv = jax.random.normal(kv, (num_heads, d_in, d_head), dtype=jnp.float32) * 0.1

    out = multi_head_attention(x, wq, wk, wv)
    out = jax.block_until_ready(out)

    ref = _reference(x, wq, wk, wv)
    assert out.shape == (B, T, num_heads * d_head), out.shape
    # bf16 MXU inputs (f32 accumulation) -> loosened tolerance vs the f32 reference.
    max_err = float(jnp.abs(out - ref).max())
    assert jnp.allclose(out, ref, atol=3e-2, rtol=3e-2), max_err

    print("KERNEL_OK")
</pallas_src>

<mosaic_0001>
module attributes {stable_mosaic.version = 11 : i64} {
  func.func @_qkv_proj_kernel(%arg0: i32, %arg1: i32, %arg2: memref<1x8x32xbf16, #tpu.memory_space<vmem>>, %arg3: memref<1x32x8xbf16, #tpu.memory_space<vmem>>, %arg4: memref<1x32x8xbf16, #tpu.memory_space<vmem>>, %arg5: memref<1x32x8xbf16, #tpu.memory_space<vmem>>, %arg6: memref<1x1x8x8xbf16, #tpu.memory_space<vmem>>, %arg7: memref<1x1x8x8xbf16, #tpu.memory_space<vmem>>, %arg8: memref<1x1x8x8xbf16, #tpu.memory_space<vmem>>) attributes {dimension_semantics = [#tpu.dimension_semantics<parallel>, #tpu.dimension_semantics<parallel>], iteration_bounds = array<i64: 2, 4>, scalar_prefetch = 0 : i64, scratch_operands = 0 : i64, tpu.core_type = #tpu.core_type<tc>, window_params = [{transform_indices = @transform_0, window_bounds = array<i64: 1, 8, 32>}, {transform_indices = @transform_1, window_bounds = array<i64: 1, 32, 8>}, {transform_indices = @transform_2, window_bounds = array<i64: 1, 32, 8>}, {transform_indices = @transform_3, window_bounds = array<i64: 1, 32, 8>}, {transform_indices = @transform_4, window_bounds = array<i64: 1, 1, 8, 8>}, {transform_indices = @transform_5, window_bounds = array<i64: 1, 1, 8, 8>}, {transform_indices = @transform_6, window_bounds = array<i64: 1, 1, 8, 8>}]} {
    %c0 = arith.constant 0 : index
    %c0_0 = arith.constant 0 : index
    %c0_1 = arith.constant 0 : index
    %0 = vector.load %arg2[%c0, %c0_0, %c0_1] : memref<1x8x32xbf16, #tpu.memory_space<vmem>>, vector<1x8x32xbf16>
    %1 = vector.shape_cast %0 : vector<1x8x32xbf16> to vector<8x32xbf16>
    %c0_2 = arith.constant 0 : index
    %c0_3 = arith.constant 0 : index
    %c0_4 = arith.constant 0 : index
    %2 = vector.load %arg3[%c0_2, %c0_3, %c0_4] : memref<1x32x8xbf16, #tpu.memory_space<vmem>>, vector<1x32x8xbf16>
    %3 = vector.shape_cast %2 : vector<1x32x8xbf16> to vector<32x8xbf16>
    %cst = arith.constant dense<0.000000e+00> : vector<8x8xf32>
    %4 = tpu.matmul %1, %3, %cst {dimension_numbers = #tpu.dot_dimension_numbers<[1], [0], [0], [1], [0, 0, 1, 1], [], []>} : vector<8x32xbf16>, vector<32x8xbf16>, vector<8x8xf32> -> vector<8x8xf32>
    %5 = arith.truncf %4 : vector<8x8xf32> to vector<8x8xbf16>
    %c0_5 = arith.constant 0 : index
    %c0_6 = arith.constant 0 : index
    %c0_7 = arith.constant 0 : index
    %c0_8 = arith.constant 0 : index
    %6 = vector.load %arg6[%c0_5, %c0_6, %c0_7, %c0_8] : memref<1x1x8x8xbf16, #tpu.memory_space<vmem>>, vector<1x1x8x8xbf16>
    %7 = vector.shape_cast %6 : vector<1x1x8x8xbf16> to vector<8x8xbf16>
    %8 = vector.shape_cast %5 : vector<8x8xbf16> to vector<1x1x8x8xbf16>
    tpu.vector_store %arg6[%c0_5, %c0_6, %c0_7, %c0_8], %8 {strides = array<i32>} : memref<1x1x8x8xbf16, #tpu.memory_space<vmem>>, vector<1x1x8x8xbf16>,
    %c0_9 = arith.constant 0 : index
    %c0_10 = arith.constant 0 : index
    %c0_11 = arith.constant 0 : index
    %9 = vector.load %arg4[%c0_9, %c0_10, %c0_11] : memref<1x32x8xbf16, #tpu.memory_space<vmem>>, vector<1x32x8xbf16>
    %10 = vector.shape_cast %9 : vector<1x32x8xbf16> to vector<32x8xbf16>
    %cst_12 = arith.constant dense<0.000000e+00> : vector<8x8xf32>
    %11 = tpu.matmul %1, %10, %cst_12 {dimension_numbers = #tpu.dot_dimension_numbers<[1], [0], [0], [1], [0, 0, 1, 1], [], []>} : vector<8x32xbf16>, vector<32x8xbf16>, vector<8x8xf32> -> vector<8x8xf32>
    %12 = arith.truncf %11 : vector<8x8xf32> to vector<8x8xbf16>
    %c0_13 = arith.constant 0 : index
    %c0_14 = arith.constant 0 : index
    %c0_15 = arith.constant 0 : index
    %c0_16 = arith.constant 0 : index
    %13 = vector.load %arg7[%c0_13, %c0_14, %c0_15, %c0_16] : memref<1x1x8x8xbf16, #tpu.memory_space<vmem>>, vector<1x1x8x8xbf16>
    %14 = vector.shape_cast %13 : vector<1x1x8x8xbf16> to vector<8x8xbf16>
    %15 = vector.shape_cast %12 : vector<8x8xbf16> to vector<1x1x8x8xbf16>
    tpu.vector_store %arg7[%c0_13, %c0_14, %c0_15, %c0_16], %15 {strides = array<i32>} : memref<1x1x8x8xbf16, #tpu.memory_space<vmem>>, vector<1x1x8x8xbf16>,
    %c0_17 = arith.constant 0 : index
    %c0_18 = arith.constant 0 : index
    %c0_19 = arith.constant 0 : index
    %16 = vector.load %arg5[%c0_17, %c0_18, %c0_19] : memref<1x32x8xbf16, #tpu.memory_space<vmem>>, vector<1x32x8xbf16>
    %17 = vector.shape_cast %16 : vector<1x32x8xbf16> to vector<32x8xbf16>
    %cst_20 = arith.constant dense<0.000000e+00> : vector<8x8xf32>
    %18 = tpu.matmul %1, %17, %cst_20 {dimension_numbers = #tpu.dot_dimension_numbers<[1], [0], [0], [1], [0, 0, 1, 1], [], []>} : vector<8x32xbf16>, vector<32x8xbf16>, vector<8x8xf32> -> vector<8x8xf32>
    %19 = arith.truncf %18 : vector<8x8xf32> to vector<8x8xbf16>
    %c0_21 = arith.constant 0 : index
    %c0_22 = arith.constant 0 : index
    %c0_23 = arith.constant 0 : index
    %c0_24 = arith.constant 0 : index
    %20 = vector.load %arg8[%c0_21, %c0_22, %c0_23, %c0_24] : memref<1x1x8x8xbf16, #tpu.memory_space<vmem>>, vector<1x1x8x8xbf16>
    %21 = vector.shape_cast %20 : vector<1x1x8x8xbf16> to vector<8x8xbf16>
    %22 = vector.shape_cast %19 : vector<8x8xbf16> to vector<1x1x8x8xbf16>
    tpu.vector_store %arg8[%c0_21, %c0_22, %c0_23, %c0_24], %22 {strides = array<i32>} : memref<1x1x8x8xbf16, #tpu.memory_space<vmem>>, vector<1x1x8x8xbf16>,
    return
  }
  func.func @transform_0(%arg0: i32, %arg1: i32) -> (i32, i32, i32) {
    %c0_i32 = arith.constant 0 : i32
    %c0_i32_0 = arith.constant 0 : i32
    %c0_i32_1 = arith.constant 0 : i32
    return %arg0, %c0_i32, %c0_i32_0 : i32, i32, i32
  }
  func.func @transform_1(%arg0: i32, %arg1: i32) -> (i32, i32, i32) {
    %c0_i32 = arith.constant 0 : i32
    %c0_i32_0 = arith.constant 0 : i32
    %c0_i32_1 = arith.constant 0 : i32
    return %arg1, %c0_i32, %c0_i32_0 : i32, i32, i32
  }
  func.func @transform_2(%arg0: i32, %arg1: i32) -> (i32, i32, i32) {
    %c0_i32 = arith.constant 0 : i32
    %c0_i32_0 = arith.constant 0 : i32
    %c0_i32_1 = arith.constant 0 : i32
    return %arg1, %c0_i32, %c0_i32_0 : i32, i32, i32
  }
  func.func @transform_3(%arg0: i32, %arg1: i32) -> (i32, i32, i32) {
    %c0_i32 = arith.constant 0 : i32
    %c0_i32_0 = arith.constant 0 : i32
    %c0_i32_1 = arith.constant 0 : i32
    return %arg1, %c0_i32, %c0_i32_0 : i32, i32, i32
  }
  func.func @transform_4(%arg0: i32, %arg1: i32) -> (i32, i32, i32, i32) {
    %c0_i32 = arith.constant 0 : i32
    %c0_i32_0 = arith.constant 0 : i32
    %c0_i32_1 = arith.constant 0 : i32
    return %arg0, %arg1, %c0_i32, %c0_i32_0 : i32, i32, i32, i32
  }
  func.func @transform_5(%arg0: i32, %arg1: i32) -> (i32, i32, i32, i32) {
    %c0_i32 = arith.constant 0 : i32
    %c0_i32_0 = arith.constant 0 : i32
    %c0_i32_1 = arith.constant 0 : i32
    return %arg0, %arg1, %c0_i32, %c0_i32_0 : i32, i32, i32, i32
  }
  func.func @transform_6(%arg0: i32, %arg1: i32) -> (i32, i32, i32, i32) {
    %c0_i32 = arith.constant 0 : i32
    %c0_i32_0 = arith.constant 0 : i32
    %c0_i32_1 = arith.constant 0 : i32
    return %arg0, %arg1, %c0_i32, %c0_i32_0 : i32, i32, i32, i32
  }
}

</mosaic_0001>

<llo_original>
// kernel: tpu_custom_call.1
$region0: #{tpu_custom_call.1}
  #allocation0 [shape = 'u32[]', space=smem, size = 0x4, offset = 0x4, fixed_abs, tag = 'smem constant byte address 0x4 - core index']
  #allocation1 [shape = 'u32[72,128]{1,0:T(1,128)}', space=vmem, size = 0x9000, scoped, tag = 'internal scratch']
  %s0 = inlined_call_operand.vmem [shape: bf16[2,8,32], index: 0, kind: input, shape index: {}]
  %s1 = inlined_call_operand.vmem [shape: bf16[4,32,8], index: 1, kind: input, shape index: {}]
  %s2 = inlined_call_operand.vmem [shape: bf16[4,32,8], index: 2, kind: input, shape index: {}]
  %s3 = inlined_call_operand.vmem [shape: bf16[4,32,8], index: 3, kind: input, shape index: {}]
  %s4 = inlined_call_operand.hbm [shape: bf16[2,4,8,8], index: 4, kind: output, shape index: {0}]
  %s5 = inlined_call_operand.hbm [shape: bf16[2,4,8,8], index: 5, kind: output, shape index: {1}]
  %s6 = inlined_call_operand.hbm [shape: bf16[2,4,8,8], index: 6, kind: output, shape index: {2}]
  %7 = xla_tuple %s4, %s5, %s6
  %s8 = sld [smem:[#allocation0]]
  $region65: #{tpu_custom_call.1} parent=0
    _
  %s10 = ssub.s32 1, %s8
  %s11 = scalar_select 0, %s10, %s8
  $region1: #{tpu_custom_call.1} parent=0
    #allocation2 [shape = 'u8[4096]{0}', space=vmem, size = 0x1000, scoped, tag = 'output window, operand 0']
    #allocation3 [shape = 's32[2]{0}', space=sflag, size = 0x8, scoped, tag = 'scoped memory for tpu_custom_call.1']
    #allocation4 [shape = 'u8[4096]{0}', space=vmem, size = 0x1000, scoped, tag = 'output window, operand 1']
    #allocation5 [shape = 's32[2]{0}', space=sflag, size = 0x8, scoped, tag = 'scoped memory for tpu_custom_call.1']
    #allocation6 [shape = 'u8[4096]{0}', space=vmem, size = 0x1000, scoped, tag = 'output window, operand 2']
    %12 = vsyncpa [#allocation3], 0
    %s13 = scalar_lea.sflag [#allocation3], 1
    %14 = vsyncpa %s13, 0
    %15 = vsyncpa [#allocation5], 0
    %s16 = scalar_lea.sflag [#allocation5], 1
    %17 = vsyncpa %s16, 0
    loop: start=0, step=1, limit=10
    $region2: #{tpu_custom_call.1} parent=1 // loop_pre_header
      _
    $region3: #{tpu_custom_call.1} parent=1 // loop_header
      %s19 = sphi 0, %s23
      %p20 = scmp.ge.s32.totalorder %s19, 10
      %s26 = sphi 0, %s38
      %s27 = sphi 0, %s34
      %s28 = sphi 0, %s26
      %s29 = sphi 0, %s27
      %s30 = sphi 0, %s28
      %s31 = sphi 0, %s29
      %s41 = sphi 0, %s43
      %s44 = sphi 0, %s41
      %s45 = sphi 0, %s44
      %s61 = sphi 0, %s45
      %s67 = sphi 0, %s69
      %s70 = sphi 0, %s67
      %s71 = sphi 0, %s70
      %s87 = sphi 0, %s71
      %s93 = sphi 0, %s95
      %s96 = sphi 0, %s93
      %s97 = sphi 0, %s96
      %s113 = sphi 0, %s97
      %s119 = sphi 0, %s121
      %s122 = sphi 0, %s119
      %s123 = sphi 0, %s122
      %s139 = sphi 0, %s123
      %s147 = sphi 0, %s149
      %s150 = sphi 0, %s147
      %s151 = sphi 0, %s150
      %s167 = sphi 0, %s151
      %s175 = sphi 0, %s177
      %s178 = sphi 0, %s175
      %s179 = sphi 0, %s178
      %s195 = sphi 0, %s179
      %s203 = sphi 0, %s205
      %s206 = sphi 0, %s203
      %s207 = sphi 0, %s206
      %s223 = sphi 0, %s207
    $region4: #{tpu_custom_call.1} parent=1 // loop_header_branch
      %22 = sbr.rel (%p20) target = $region8
    $region5: #{tpu_custom_call.1} parent=1 // loop_body
      %s24 = ssub.s32 %s19, 1
      %s25 = ssub.s32 %s19, 2
      %s32 = sadd.s32 1, %s27
      %p33 = scmp.ge.s32.totalorder %s32, 4
      %s34 = scalar_select %p33, 0, %s32
      %s35 = sadd.s32 1, %s26
      %s36 = scalar_select %p33, %s35, %s26
      %p37 = scmp.ge.s32.totalorder %s36, 2
      %s38 = scalar_select %p37, 0, %s36
      %s39 = ssub.s32 %s26, %s38
      %p40 = scmp.eq.s32.totalorder %s39, 0
      %s42 = sadd.s32 %s41, 1
      %s43 = scalar_select %p40, %s41, %s42
      %p46 = pneg %p40
      %p47 = scmp.eq.s32.totalorder %s19, 7
      %p48 = por %p46, %p47
      %p49 = scmp.ne.s32.totalorder %s41, %s44
      %p50 = scmp.eq.s32.totalorder %s19, 0
      %p51 = por %p49, %p50
      %p52 = scmp.ne.s32.totalorder %s41, %s44
      %p53 = scmp.eq.s32.totalorder %s24, 7
      %p54 = por %p52, %p53
      %p55 = scmp.ne.s32.totalorder %s44, %s45
      %p56 = scmp.eq.s32.totalorder %s24, 0
      %p57 = por %p55, %p56
      %p58 = scmp.ne.s32.totalorder %s44, %s45
      %p59 = scmp.eq.s32.totalorder %s25, 7
      %p60 = por %p58, %p59
      %p62 = scmp.ne.s32.totalorder %s45, %s61
      %p63 = scmp.eq.s32.totalorder %s25, 0
      %p64 = por %p62, %p63
      %s65 = ssub.s32 %s27, %s34
      %p66 = scmp.eq.s32.totalorder %s65, 0
      %s68 = sadd.s32 %s67, 1
      %s69 = scalar_select %p66, %s67, %s68
      %p72 = pneg %p66
      %p73 = scmp.eq.s32.totalorder %s19, 7
      %p74 = por %p72, %p73
      %p75 = scmp.ne.s32.totalorder %s67, %s70
      %p76 = scmp.eq.s32.totalorder %s19, 0
      %p77 = por %p75, %p76
      %p78 = scmp.ne.s32.totalorder %s67, %s70
      %p79 = scmp.eq.s32.totalorder %s24, 7
      %p80 = por %p78, %p79
      %p81 = scmp.ne.s32.totalorder %s70, %s71
      %p82 = scmp.eq.s32.totalorder %s24, 0
      %p83 = por %p81, %p82
      %p84 = scmp.ne.s32.totalorder %s70, %s71
      %p85 = scmp.eq.s32.totalorder %s25, 7
      %p86 = por %p84, %p85
      %p88 = scmp.ne.s32.totalorder %s71, %s87
      %p89 = scmp.eq.s32.totalorder %s25, 0
      %p90 = por %p88, %p89
      %s91 = ssub.s32 %s27, %s34
      %p92 = scmp.eq.s32.totalorder %s91, 0
      %s94 = sadd.s32 %s93, 1
      %s95 = scalar_select %p92, %s93, %s94
      %p98 = pneg %p92
      %p99 = scmp.eq.s32.totalorder %s19, 7
      %p100 = por %p98, %p99
      %p101 = scmp.ne.s32.totalorder %s93, %s96
      %p102 = scmp.eq.s32.totalorder %s19, 0
      %p103 = por %p101, %p102
      %p104 = scmp.ne.s32.totalorder %s93, %s96
      %p105 = scmp.eq.s32.totalorder %s24, 7
      %p106 = por %p104, %p105
      %p107 = scmp.ne.s32.totalorder %s96, %s97
      %p108 = scmp.eq.s32.totalorder %s24, 0
      %p109 = por %p107, %p108
      %p110 = scmp.ne.s32.totalorder %s96, %s97
      %p111 = scmp.eq.s32.totalorder %s25, 7
      %p112 = por %p110, %p111
      %p114 = scmp.ne.s32.totalorder %s97, %s113
      %p115 = scmp.eq.s32.totalorder %s25, 0
      %p116 = por %p114, %p115
      %s117 = ssub.s32 %s27, %s34
      %p118 = scmp.eq.s32.totalorder %s117, 0
      %s120 = sadd.s32 %s119, 1
      %s121 = scalar_select %p118, %s119, %s120
      %p124 = pneg %p118
      %p125 = scmp.eq.s32.totalorder %s19, 7
      %p126 = por %p124, %p125
      %p127 = scmp.ne.s32.totalorder %s119, %s122
      %p128 = scmp.eq.s32.totalorder %s19, 0
      %p129 = por %p127, %p128
      %p130 = scmp.ne.s32.totalorder %s119, %s122
      %p131 = scmp.eq.s32.totalorder %s24, 7
      %p132 = por %p130, %p131
      %p133 = scmp.ne.s32.totalorder %s122, %s123
      %p134 = scmp.eq.s32.totalorder %s24, 0
      %p135 = por %p133, %p134
      %p136 = scmp.ne.s32.totalorder %s122, %s123
      %p137 = scmp.eq.s32.totalorder %s25, 7
      %p138 = por %p136, %p137
      %p140 = scmp.ne.s32.totalorder %s123, %s139
      %p141 = scmp.eq.s32.totalorder %s25, 0
      %p142 = por %p140, %p141
      %s143 = ssub.s32 %s26, %s38
      %s144 = ssub.s32 %s27, %s34
      %s145 = sor.u32 %s143, %s144
      %p146 = scmp.eq.s32.totalorder %s145, 0
      %s148 = sadd.s32 %s147, 1
      %s149 = scalar_select %p146, %s147, %s148
      %p152 = pneg %p146
      %p153 = scmp.eq.s32.totalorder %s19, 7
      %p154 = por %p152, %p153
      %p155 = scmp.ne.s32.totalorder %s147, %s150
      %p156 = scmp.eq.s32.totalorder %s19, 0
      %p157 = por %p155, %p156
      %p158 = scmp.ne.s32.totalorder %s147, %s150
      %p159 = scmp.eq.s32.totalorder %s24, 7
      %p160 = por %p158, %p159
      %p161 = scmp.ne.s32.totalorder %s150, %s151
      %p162 = scmp.eq.s32.totalorder %s24, 0
      %p163 = por %p161, %p162
      %p164 = scmp.ne.s32.totalorder %s150, %s151
      %p165 = scmp.eq.s32.totalorder %s25, 7
      %p166 = por %p164, %p165
      %p168 = scmp.ne.s32.totalorder %s151, %s167
      %p169 = scmp.eq.s32.totalorder %s25, 0
      %p170 = por %p168, %p169
      %s171 = ssub.s32 %s26, %s38
      %s172 = ssub.s32 %s27, %s34
      %s173 = sor.u32 %s171, %s172
      %p174 = scmp.eq.s32.totalorder %s173, 0
      %s176 = sadd.s32 %s175, 1
      %s177 = scalar_select %p174, %s175, %s176
      %p180 = pneg %p174
      %p181 = scmp.eq.s32.totalorder %s19, 7
      %p182 = por %p180, %p181
      %p183 = scmp.ne.s32.totalorder %s175, %s178
      %p184 = scmp.eq.s32.totalorder %s19, 0
      %p185 = por %p183, %p184
      %p186 = scmp.ne.s32.totalorder %s175, %s178
      %p187 = scmp.eq.s32.totalorder %s24, 7
      %p188 = por %p186, %p187
      %p189 = scmp.ne.s32.totalorder %s178, %s179
      %p190 = scmp.eq.s32.totalorder %s24, 0
      %p191 = por %p189, %p190
      %p192 = scmp.ne.s32.totalorder %s178, %s179
      %p193 = scmp.eq.s32.totalorder %s25, 7
      %p194 = por %p192, %p193
      %p196 = scmp.ne.s32.totalorder %s179, %s195
      %p197 = scmp.eq.s32.totalorder %s25, 0
      %p198 = por %p196, %p197
      %s199 = ssub.s32 %s26, %s38
      %s200 = ssub.s32 %s27, %s34
      %s201 = sor.u32 %s199, %s200
      %p202 = scmp.eq.s32.totalorder %s201, 0
      %s204 = sadd.s32 %s203, 1
      %s205 = scalar_select %p202, %s203, %s204
      %p208 = pneg %p202
      %p209 = scmp.eq.s32.totalorder %s19, 7
      %p210 = por %p208, %p209
      %p211 = scmp.ne.s32.totalorder %s203, %s206
      %p212 = scmp.eq.s32.totalorder %s19, 0
      %p213 = por %p211, %p212
      %p214 = scmp.ne.s32.totalorder %s203, %s206
      %p215 = scmp.eq.s32.totalorder %s24, 7
      %p216 = por %p214, %p215
      %p217 = scmp.ne.s32.totalorder %s206, %s207
      %p218 = scmp.eq.s32.totalorder %s24, 0
      %p219 = por %p217, %p218
      %p220 = scmp.ne.s32.totalorder %s206, %s207
      %p221 = scmp.eq.s32.totalorder %s25, 7
      %p222 = por %p220, %p221
      %p224 = scmp.ne.s32.totalorder %s207, %s223
      %p225 = scmp.eq.s32.totalorder %s25, 0
      %p226 = por %p224, %p225
      %p227 = scmp.le.s32.totalorder 1, %s19
      %p228 = scmp.lt.s32.totalorder %s19, 9
      %p229 = pnand %p227, %p228
      %p230 = pneg %p229
      // Predicated region
      $region9: #{tpu_custom_call.1} parent=5 // pred_check
        _
      $region10: #{tpu_custom_call.1} parent=5 // pred_check_branch
        %232 = sbr.rel (%p229) target = $region12
      $region11: #{tpu_custom_call.1} parent=5 // pred_region
        %s233 = ssub.s32 %s19, 1
      $region12: #{tpu_custom_call.1} parent=5 // pred_fallthru
        _
      %p234 = scmp.lt.s32.totalorder %s19, 8
      // Predicated region
      $region13: #{tpu_custom_call.1} parent=5 // pred_check
        %p235 = pneg %p234
      $region14: #{tpu_custom_call.1} parent=5 // pred_check_branch
        %237 = sbr.rel (%p235) target = $region16
      $region15: #{tpu_custom_call.1} parent=5 // pred_region
        // Predicated region
        $region17: #{tpu_custom_call.1} parent=15 // pred_check
          %p238 = pneg %p51
        $region18: #{tpu_custom_call.1} parent=15 // pred_check_branch
          %240 = sbr.rel (%p238) target = $region20
        $region19: #{tpu_custom_call.1} parent=15 // pred_region
          %p241 = scmp.lt.s32.totalorder %s26, 1
          %s242 = scalar_select %p241, %s26, 1
          %s243 = smul.addr %s242, 4
          %s244 = scalar_lea.vmem %s0, %s243
        $region20: #{tpu_custom_call.1} parent=15 // pred_fallthru
          _
        // Predicated region
        $region21: #{tpu_custom_call.1} parent=15 // pred_check
          %p245 = pneg %p77
        $region22: #{tpu_custom_call.1} parent=15 // pred_check_branch
          %247 = sbr.rel (%p245) target = $region24
        $region23: #{tpu_custom_call.1} parent=15 // pred_region
          %p248 = scmp.lt.s32.totalorder %s27, 3
          %s249 = scalar_select %p248, %s27, 3
          %s250 = smul.addr %s249, 4
          %s251 = smul.addr %s250, 4
          %s252 = scalar_lea.vmem %s1, %s251
        $region24: #{tpu_custom_call.1} parent=15 // pred_fallthru
          _
        // Predicated region
        $region25: #{tpu_custom_call.1} parent=15 // pred_check
          %p253 = pneg %p103
        $region26: #{tpu_custom_call.1} parent=15 // pred_check_branch
          %255 = sbr.rel (%p253) target = $region28
        $region27: #{tpu_custom_call.1} parent=15 // pred_region
          %p256 = scmp.lt.s32.totalorder %s27, 3
          %s257 = scalar_select %p256, %s27, 3
          %s258 = smul.addr %s257, 4
          %s259 = smul.addr %s258, 4
          %s260 = scalar_lea.vmem %s2, %s259
        $region28: #{tpu_custom_call.1} parent=15 // pred_fallthru
          _
        // Predicated region
        $region29: #{tpu_custom_call.1} parent=15 // pred_check
          %p261 = pneg %p129
        $region30: #{tpu_custom_call.1} parent=15 // pred_check_branch
          %263 = sbr.rel (%p261) target = $region32
        $region31: #{tpu_custom_call.1} parent=15 // pred_region
          %p264 = scmp.lt.s32.totalorder %s27, 3
          %s265 = scalar_select %p264, %s27, 3
          %s266 = smul.addr %s265, 4
          %s267 = smul.addr %s266, 4
          %s268 = scalar_lea.vmem %s3, %s267
        $region32: #{tpu_custom_call.1} parent=15 // pred_fallthru
          _
      $region16: #{tpu_custom_call.1} parent=5 // pred_fallthru
        _
      %p269 = scmp.le.s32.totalorder 1, %s19
      %p270 = scmp.lt.s32.totalorder %s19, 9
      %p271 = pnand %p269, %p270
      %p272 = pneg %p271
      // Predicated region
      $region33: #{tpu_custom_call.1} parent=5 // pred_check
        _
      $region34: #{tpu_custom_call.1} parent=5 // pred_check_branch
        %274 = sbr.rel (%p271) target = $region36
      $region35: #{tpu_custom_call.1} parent=5 // pred_region
        %s275 = ssub.s32 %s19, 1
        %p276 = scmp.lt.s32.totalorder %s28, 1
        %s277 = scalar_select %p276, %s28, 1
        %s278 = smul.addr %s277, 4
        %s279 = scalar_lea.vmem %s0, %s278
        %p280 = pneg %p57
        %p281 = pneg %p54
        %p282 = scmp.lt.s32.totalorder %s29, 3
        %s283 = scalar_select %p282, %s29, 3
        %s284 = smul.addr %s283, 4
        %s285 = smul.addr %s284, 4
        %s286 = scalar_lea.vmem %s1, %s285
        %p287 = pneg %p83
        %p288 = pneg %p80
        %p289 = scmp.lt.s32.totalorder %s29, 3
        %s290 = scalar_select %p289, %s29, 3
        %s291 = smul.addr %s290, 4
        %s292 = smul.addr %s291, 4
        %s293 = scalar_lea.vmem %s2, %s292
        %p294 = pneg %p109
        %p295 = pneg %p106
        %p296 = scmp.lt.s32.totalorder %s29, 3
        %s297 = scalar_select %p296, %s29, 3
        %s298 = smul.addr %s297, 4
        %s299 = smul.addr %s298, 4
        %s300 = scalar_lea.vmem %s3, %s299
        %p301 = pneg %p135
        %p302 = pneg %p132
        %p303 = pneg %p163
        %p304 = pneg %p160
        %s305 = sand.u32 %s150, 1
        %s306 = scalar_lea.sflag [#allocation3], %s305
        %s307 = sand.u32 %s150, 1
        %s308 = smul.addr %s307, 4
        %s309 = scalar_lea.vmem [#allocation2], %s308
        %p310 = pneg %p191
        %p311 = pneg %p188
        %s312 = sand.u32 %s24, 1
        %s313 = scalar_lea.sflag [#allocation5], %s312
        %s314 = sand.u32 %s178, 1
        %s315 = smul.addr %s314, 4
        %s316 = scalar_lea.vmem [#allocation4], %s315
        %p317 = pneg %p219
        %p318 = pneg %p216
        %s319 = sand.u32 %s24, 1
        %s320 = scalar_lea.sflag [#allocation5], %s319
        %s321 = sand.u32 %s206, 1
        %s322 = smul.addr %s321, 4
        %s323 = scalar_lea.vmem [#allocation6], %s322
        %p324 = scmp.lt.s32.totalorder %s28, 1
        %s325 = scalar_select %p324, %s28, 1
        %s326 = smul.addr %s325, 4
        %s327 = scalar_lea.vmem %s0, %s326
        %p328 = scmp.lt.s32.totalorder %s29, 3
        %s329 = scalar_select %p328, %s29, 3
        %s330 = smul.addr %s329, 4
        %s331 = smul.addr %s330, 4
        %s332 = scalar_lea.vmem %s1, %s331
        %p333 = scmp.lt.s32.totalorder %s29, 3
        %s334 = scalar_select %p333, %s29, 3
        %s335 = smul.addr %s334, 4
        %s336 = smul.addr %s335, 4
        %s337 = scalar_lea.vmem %s2, %s336
        %p338 = scmp.lt.s32.totalorder %s29, 3
        %s339 = scalar_select %p338, %s29, 3
        %s340 = smul.addr %s339, 4
        %s341 = smul.addr %s340, 4
        %s342 = scalar_lea.vmem %s3, %s341
        %v344 = vld [vmem:[%s327] sm:$0xf]
        %v345 = vld [vmem:[%s332] sm:$0xf]
        %v346 = vld [vmem:[%s332 + $0x4] sm:$0xf]
        %v347 = vld [vmem:[%s332 + $0x8] sm:$0xf]
        %v348 = vld [vmem:[%s332 + $0xc] sm:$0xf]
        %v353 = vunpack.c.l.b16 %v345
        %v354 = vunpack.c.l.b16 %v346
        %v355 = vunpack.c.l.b16 %v347
        %v356 = vunpack.c.l.b16 %v348
        %v357 = vpack.c.b16 %v354, %v353
        %v358 = vpack.c.b16 %v356, %v355
        %vm361 = vcmask 261120
        %v363 = vsel %vm361, %v344, 0
        %365 = vmatpush.bf16.msra.mxu0 0
        %366 = vmatpush.bf16.msra.mxu0 0
        %367 = vmatpush.bf16.msra.mxu0 0
        %368 = vmatpush.bf16.msra.mxu0 0
        %369 = vmatpush.bf16.msra.mxu0 0
        %370 = vmatpush.bf16.msra.mxu0 0
        %371 = vmatpush.bf16.msra.mxu0 %v358
        %372 = vmatpush.bf16.msra.mxu0 %v357
        %373 = vmatmul.bf16.gmra.mxu0 %v363
        %v374 = vpop.f32.mrf.mxu0
        %v375 = vadd.f32 0.0, %v374
        %v376 = vpop.f32.mrf.mxu0
        %377 = vdwg.mxu0
        %v378 = vpack.c.bf16 %v375, %v375
        %vm379 = vcmask 60416
        %380 = vst.msk [vmem:[%s309] sm:$0xf] %vm379, %v378
        %v381 = vld [vmem:[%s337] sm:$0xf]
        %v382 = vld [vmem:[%s337 + $0x4] sm:$0xf]
        %v383 = vld [vmem:[%s337 + $0x8] sm:$0xf]
        %v384 = vld [vmem:[%s337 + $0xc] sm:$0xf]
        %v389 = vunpack.c.l.b16 %v381
        %v390 = vunpack.c.l.b16 %v382
        %v391 = vunpack.c.l.b16 %v383
        %v392 = vunpack.c.l.b16 %v384
        %v393 = vpack.c.b16 %v390, %v389
        %v394 = vpack.c.b16 %v392, %v391
        %397 = vmatpush.bf16.msra.mxu0 0
        %398 = vmatpush.bf16.msra.mxu0 0
        %399 = vmatpush.bf16.msra.mxu0 0
        %400 = vmatpush.bf16.msra.mxu0 0
        %401 = vmatpush.bf16.msra.mxu0 0
        %402 = vmatpush.bf16.msra.mxu0 0
        %403 = vmatpush.bf16.msra.mxu0 %v394
        %404 = vmatpush.bf16.msra.mxu0 %v393
        %405 = vmatmul.bf16.gmra.mxu0 %v363
        %v406 = vpop.f32.mrf.mxu0
        %v407 = vadd.f32 0.0, %v406
        %v408 = vpop.f32.mrf.mxu0
        %409 = vdwg.mxu0
        %v410 = vpack.c.bf16 %v407, %v407
        %411 = vst.msk [vmem:[%s316] sm:$0xf] %vm379, %v410
        %v412 = vld [vmem:[%s342] sm:$0xf]
        %v413 = vld [vmem:[%s342 + $0x4] sm:$0xf]
        %v414 = vld [vmem:[%s342 + $0x8] sm:$0xf]
        %v415 = vld [vmem:[%s342 + $0xc] sm:$0xf]
        %v420 = vunpack.c.l.b16 %v412
        %v421 = vunpack.c.l.b16 %v413
        %v422 = vunpack.c.l.b16 %v414
        %v423 = vunpack.c.l.b16 %v415
        %v424 = vpack.c.b16 %v421, %v420
        %v425 = vpack.c.b16 %v423, %v422
        %428 = vmatpush.bf16.msra.mxu0 0
        %429 = vmatpush.bf16.msra.mxu0 0
        %430 = vmatpush.bf16.msra.mxu0 0
        %431 = vmatpush.bf16.msra.mxu0 0
        %432 = vmatpush.bf16.msra.mxu0 0
        %433 = vmatpush.bf16.msra.mxu0 0
        %434 = vmatpush.bf16.msra.mxu0 %v425
        %435 = vmatpush.bf16.msra.mxu0 %v424
        %436 = vmatmul.bf16.gmra.mxu0 %v363
        %v437 = vpop.f32.mrf.mxu0
        %v438 = vadd.f32 0.0, %v437
        %v439 = vpop.f32.mrf.mxu0
        %440 = vdwg.mxu0
        %v441 = vpack.c.bf16 %v438, %v438
        %442 = vst.msk [vmem:[%s323] sm:$0xf] %vm379, %v441
        %s443 = sand.u32 %s150, 1
        %s444 = scalar_lea.sflag [#allocation3], %s443
        %s445 = sand.u32 %s150, 1
        %s446 = smul.addr %s445, 4
        %s447 = scalar_lea.vmem [#allocation2], %s446
        %s448 = sand.u32 %s24, 1
        %s449 = scalar_lea.sflag [#allocation5], %s448
        %s450 = sand.u32 %s178, 1
        %s451 = smul.addr %s450, 4
        %s452 = scalar_lea.vmem [#allocation4], %s451
        %s453 = sand.u32 %s24, 1
        %s454 = scalar_lea.sflag [#allocation5], %s453
        %s455 = sand.u32 %s206, 1
        %s456 = smul.addr %s455, 4
        %s457 = scalar_lea.vmem [#allocation6], %s456
        // Predicated region
        $region37: #{tpu_custom_call.1} parent=35 // pred_check
          %p458 = pneg %p160
        $region38: #{tpu_custom_call.1} parent=35 // pred_check_branch
          %460 = sbr.rel (%p458) target = $region40
        $region39: #{tpu_custom_call.1} parent=35 // pred_region
          %462 = vsyncadd %s444, 0
          %s463 = smul.addr %s28, 4
          %s464 = sadd.s32 %s29, %s463
          %s465 = smul.addr %s464, 4
          %s466 = scalar_lea.hbm %s4, %s465
          %s468 = sshll.u32 %s447, 4
          %s469 = int_to_ptr.vmem [resolvable:$true] %s468
          %s470 = sshll.u32 %s466, 4
          %s471 = int_to_ptr.hbm [resolvable:$true] %s470
          %473 = dma.vmem_to_hbm [thread:$0]  %s469, 64, %s471, %s444
        $region40: #{tpu_custom_call.1} parent=35 // pred_fallthru
          _
        // Predicated region
        $region41: #{tpu_custom_call.1} parent=35 // pred_check
          %p474 = pneg %p188
        $region42: #{tpu_custom_call.1} parent=35 // pred_check_branch
          %476 = sbr.rel (%p474) target = $region44
        $region43: #{tpu_custom_call.1} parent=35 // pred_region
          %478 = vsyncadd %s449, 0
          %s479 = smul.addr %s28, 4
          %s480 = sadd.s32 %s29, %s479
          %s481 = smul.addr %s480, 4
          %s482 = scalar_lea.hbm %s5, %s481
          %s484 = sshll.u32 %s452, 4
          %s485 = int_to_ptr.vmem [resolvable:$true] %s484
          %s486 = sshll.u32 %s482, 4
          %s487 = int_to_ptr.hbm [resolvable:$true] %s486
          %489 = dma.vmem_to_hbm [thread:$0]  %s485, 64, %s487, %s449
        $region44: #{tpu_custom_call.1} parent=35 // pred_fallthru
          _
        // Predicated region
        $region45: #{tpu_custom_call.1} parent=35 // pred_check
          %p490 = pneg %p216
        $region46: #{tpu_custom_call.1} parent=35 // pred_check_branch
          %492 = sbr.rel (%p490) target = $region48
        $region47: #{tpu_custom_call.1} parent=35 // pred_region
          %494 = vsyncadd %s454, 0
          %s495 = smul.addr %s28, 4
          %s496 = sadd.s32 %s29, %s495
          %s497 = smul.addr %s496, 4
          %s498 = scalar_lea.hbm %s6, %s497
          %s500 = sshll.u32 %s457, 4
          %s501 = int_to_ptr.vmem [resolvable:$true] %s500
          %s502 = sshll.u32 %s498, 4
          %s503 = int_to_ptr.hbm [resolvable:$true] %s502
          %505 = dma.vmem_to_hbm [thread:$0]  %s501, 64, %s503, %s454
        $region48: #{tpu_custom_call.1} parent=35 // pred_fallthru
          _
      $region36: #{tpu_custom_call.1} parent=5 // pred_fallthru
        _
      %p506 = scmp.le.s32.totalorder 2, %s19
      // Predicated region
      $region49: #{tpu_custom_call.1} parent=5 // pred_check
        %p507 = pneg %p506
      $region50: #{tpu_custom_call.1} parent=5 // pred_check_branch
        %509 = sbr.rel (%p507) target = $region52
      $region51: #{tpu_custom_call.1} parent=5 // pred_region
        %s510 = ssub.s32 %s19, 2
        // Predicated region
        $region53: #{tpu_custom_call.1} parent=51 // pred_check
          %p511 = pneg %p166
        $region54: #{tpu_custom_call.1} parent=51 // pred_check_branch
          %513 = sbr.rel (%p511) target = $region56
        $region55: #{tpu_custom_call.1} parent=51 // pred_region
          %s514 = sand.u32 %s151, 1
          %s515 = scalar_lea.sflag [#allocation3], %s514
          %s516 = sand.u32 %s151, 1
          %s517 = smul.addr %s516, 4
          %s518 = scalar_lea.vmem [#allocation2], %s517
          %520 = dma.done %s515, 64
        $region56: #{tpu_custom_call.1} parent=51 // pred_fallthru
          _
        // Predicated region
        $region57: #{tpu_custom_call.1} parent=51 // pred_check
          %p521 = pneg %p194
        $region58: #{tpu_custom_call.1} parent=51 // pred_check_branch
          %523 = sbr.rel (%p521) target = $region60
        $region59: #{tpu_custom_call.1} parent=51 // pred_region
          %s524 = sand.u32 %s25, 1
          %s525 = scalar_lea.sflag [#allocation5], %s524
          %s526 = sand.u32 %s179, 1
          %s527 = smul.addr %s526, 4
          %s528 = scalar_lea.vmem [#allocation4], %s527
          %530 = dma.done %s525, 64
        $region60: #{tpu_custom_call.1} parent=51 // pred_fallthru
          _
        // Predicated region
        $region61: #{tpu_custom_call.1} parent=51 // pred_check
          %p531 = pneg %p222
        $region62: #{tpu_custom_call.1} parent=51 // pred_check_branch
          %533 = sbr.rel (%p531) target = $region64
        $region63: #{tpu_custom_call.1} parent=51 // pred_region
          %s534 = sand.u32 %s25, 1
          %s535 = scalar_lea.sflag [#allocation5], %s534
          %s536 = sand.u32 %s207, 1
          %s537 = smul.addr %s536, 4
          %s538 = scalar_lea.vmem [#allocation6], %s537
          %540 = dma.done %s535, 64
        $region64: #{tpu_custom_call.1} parent=51 // pred_fallthru
          _
      $region52: #{tpu_custom_call.1} parent=5 // pred_fallthru
        _
    $region6: #{tpu_custom_call.1} parent=1 // loop_footer
      %s23 = sadd.s32 1, %s19
    $region7: #{tpu_custom_call.1} parent=1 // loop_footer_branch
      %18 = sbr.rel target = $region3
    $region8: #{tpu_custom_call.1} parent=1 // loop_exit
      _
    %541 = vsyncpa [#allocation3], 1
    %s542 = scalar_lea.sflag [#allocation3], 1
    %543 = vsyncpa %s542, 1
    %544 = vsyncpa [#allocation5], 1
    %s545 = scalar_lea.sflag [#allocation5], 1
    %546 = vsyncpa %s545, 1

</llo_original>
